<compile_context>
chip_gen: v5e
topology: v5e:2x2
jax: 0.10.0
libtpu: 0.0.40
codegen_flags: <defaults>
</compile_context>

<pallas_src>
import functools

import jax
import jax.numpy as jnp
from jax.experimental import pallas as pl
from jax.experimental.pallas import tpu as pltpu

EPS = 1e-5  # torch.nn.LayerNorm default eps


def _round_up(x, m):
    return (x + m - 1) // m * m


def _erf_poly(x):
    # Abramowitz & Stegun 7.1.26 rational approximation, |err| <= 1.5e-7.
    # Used instead of lax.erf inside the kernel so we only rely on ops with
    # guaranteed Mosaic lowerings (exp, mul/add, select).
    a1, a2, a3, a4, a5 = (0.254829592, -0.284496736, 1.421413741,
                          -1.453152027, 1.061405429)
    p = 0.3275911
    ax = jnp.where(x >= 0.0, x, -x)
    t = 1.0 / (1.0 + p * ax)
    poly = ((((a5 * t + a4) * t + a3) * t + a2) * t + a1) * t
    y = 1.0 - poly * jnp.exp(-ax * ax)
    return jnp.where(x >= 0.0, y, -y)


def _gelu_exact(x):
    # matches torch.nn.GELU() (erf form) to ~1e-7
    return 0.5 * x * (1.0 + _erf_poly(x * 0.7071067811865476))


def _gelu_tanh(x):
    # tanh approximation -> EUP slot (otherwise idle); slight numerics change.
    c = 0.7978845608028654
    return 0.5 * x * (1.0 + jnp.tanh(c * (x + 0.044715 * x * x * x)))


def _layernorm(x, gamma, beta):
    mu = jnp.mean(x, axis=-1, keepdims=True)
    var = jnp.mean((x - mu) ** 2, axis=-1, keepdims=True)
    return (x - mu) * jax.lax.rsqrt(var + EPS) * gamma + beta


# ----------------------------------------------------------------------------
# Kernel: fuse_fn on a (T, D) slab of (prompt-row, id-row) pairs, then DMA
# scatter of the valid rows straight into the aliased prompt buffer in HBM.
# ----------------------------------------------------------------------------
def _fuse_kernel(dst_ref,                       # SMEM (n_pad,) i32: dst row or -1
                 p_ref, e_ref,                  # VMEM (T, D) paired token tiles
                 vec_ref,                       # VMEM (12, D) packed LN/bias vecs
                 w11p_ref, w11e_ref, w12_ref, w21_ref, w22_ref,   # (D, D) each
                 prompt_io_ref,                 # HBM (B*S, D) aliased with output
                 out_hbm_ref,                   # HBM (B*S, D) == prompt_io_ref
                 fused_buf, copy_sem,           # scratch VMEM (T, D), DMA sem (1,)
                 *, approx_gelu: bool):
    del prompt_io_ref  # same buffer as out_hbm_ref (input_output_aliases)
    f32 = jnp.float32
    gelu = _gelu_tanh if approx_gelu else _gelu_exact
    T = p_ref.shape[0]
    mm = w11p_ref.dtype                      # MXU operand dtype (bf16 or f32)

    p = p_ref[...].astype(f32)               # class-token prompt rows
    e = e_ref[...].astype(f32)               # paired id embeddings

    vec = vec_ref[...].astype(f32)           # (12, D) packed vectors
    g1p, g1e = vec[0:1], vec[1:2]
    b1p, b1e = vec[2:3], vec[3:4]
    b11, b12 = vec[4:5], vec[5:6]
    g2, b2 = vec[6:7], vec[7:8]
    b21, b22 = vec[8:9], vec[9:10]
    g3, b3 = vec[10:11], vec[11:12]

    # ---- LayerNorm over the virtual concat([p, e], -1) (width 2D) without
    #      materializing the (T, 2D) buffer ----
    mu = 0.5 * (jnp.mean(p, axis=-1, keepdims=True)
                + jnp.mean(e, axis=-1, keepdims=True))
    var = 0.5 * (jnp.mean((p - mu) ** 2, axis=-1, keepdims=True)
                 + jnp.mean((e - mu) ** 2, axis=-1, keepdims=True))
    inv = jax.lax.rsqrt(var + EPS)
    pn = (p - mu) * inv * g1p + b1p
    en = (e - mu) * inv * g1e + b1e

    # ---- MLP1 (use_residual=False): x @ W11 split into two D-aligned dots ----
    h = (jnp.dot(pn.astype(mm), w11p_ref[...], preferred_element_type=f32)
         + jnp.dot(en.astype(mm), w11e_ref[...], preferred_element_type=f32)
         + b11)
    h = gelu(h)
    h = jnp.dot(h.astype(mm), w12_ref[...], preferred_element_type=f32) + b12
    fused = h + p                              # "+ prompt_embeds"

    # ---- MLP2 (use_residual=True) ----
    hn = _layernorm(fused, g2, b2)
    h = jnp.dot(hn.astype(mm), w21_ref[...], preferred_element_type=f32) + b21
    h = gelu(h)
    h = jnp.dot(h.astype(mm), w22_ref[...], preferred_element_type=f32) + b22
    fused = fused + h

    # ---- final LayerNorm into the scatter staging buffer ----
    fused_buf[...] = _layernorm(fused, g3, b3).astype(fused_buf.dtype)

    # ---- scatter: DMA each valid row into the aliased prompt buffer ----
    # Rows with dst < 0 (invalid id slot / tile padding) are skipped, so all
    # other tokens keep their original bits and no full-tensor copy happens.
    base = pl.program_id(0) * T

    @pl.loop(0, T)
    def _start(r):
        d = dst_ref[base + r]

        @pl.when(d >= 0)
        def _():
            pltpu.make_async_copy(fused_buf.at[pl.ds(r, 1)],
                                  out_hbm_ref.at[pl.ds(d, 1)],
                                  copy_sem.at[0]).start()

    @pl.loop(0, T)
    def _wait(r):
        d = dst_ref[base + r]

        @pl.when(d >= 0)
        def _():
            pltpu.make_async_copy(fused_buf.at[pl.ds(r, 1)],
                                  out_hbm_ref.at[pl.ds(d, 1)],
                                  copy_sem.at[0]).wait()


# ----------------------------------------------------------------------------
# Parameters (torch layout equivalent; weights stored as (in_dim, out_dim)).
# ----------------------------------------------------------------------------
def init_params(key, D):
    ks = jax.random.split(key, 4)

    def lin(k, din, dout):
        kw, kb = jax.random.split(k)
        w = jax.random.normal(kw, (din, dout), jnp.float32) * 0.02
        b = jax.random.normal(kb, (1, dout), jnp.float32) * 0.02
        return w, b

    params = {}
    params["ln1_g"] = jnp.ones((1, 2 * D), jnp.float32)
    params["ln1_b"] = jnp.zeros((1, 2 * D), jnp.float32)
    params["w11"], params["b11"] = lin(ks[0], 2 * D, D)
    params["w12"], params["b12"] = lin(ks[1], D, D)
    params["ln2_g"] = jnp.ones((1, D), jnp.float32)
    params["ln2_b"] = jnp.zeros((1, D), jnp.float32)
    params["w21"], params["b21"] = lin(ks[2], D, D)
    params["w22"], params["b22"] = lin(ks[3], D, D)
    params["ln3_g"] = jnp.ones((1, D), jnp.float32)
    params["ln3_b"] = jnp.zeros((1, D), jnp.float32)
    return params


# ----------------------------------------------------------------------------
# Wrapper glue: per-batch masked-token plan, row gather, pallas_call, done
# (the scatter happens inside the kernel into the aliased prompt buffer).
# ----------------------------------------------------------------------------
def _fusion_plan(class_tokens_mask, B, S, M):
    mask = class_tokens_mask.astype(bool)
    num_inputs = jnp.sum(mask, axis=1)                            # (B,)
    # stable argsort puts masked positions first, preserving token order ->
    # matches torch's row-major masked gather / masked_scatter_ semantics.
    order = jnp.argsort(jnp.logical_not(mask), axis=1, stable=True)[:, :M]
    valid = jnp.arange(M)[None, :] < num_inputs[:, None]          # (B, M)
    dst = jnp.where(valid, order + jnp.arange(B)[:, None] * S, -1)
    return order, valid, dst.astype(jnp.int32)


def fuse_module_forward(prompt_embeds, id_embeds, class_tokens_mask, params,
                        *, max_tile_tokens=512, use_bf16_matmul=True,
                        approx_gelu=False):
    B, S, D = prompt_embeds.shape
    M = id_embeds.shape[1]
    dtype = prompt_embeds.dtype
    itemsize = jnp.dtype(dtype).itemsize

    order, valid, dst = _fusion_plan(class_tokens_mask, B, S, M)

    # Gather the class-token prompt rows, paired row-for-row with id_embeds[b,k]
    # (== torch's flat row-major boolean gather / masked_scatter_ pairing).
    # TODO(synk): torch asserts when mask.sum() != number of valid id rows; here
    # masked tokens beyond max_num_inputs per batch are simply left untouched.
    p_rows = jnp.take_along_axis(prompt_embeds, order[..., None], axis=1)
    p_rows = p_rows.reshape(B * M, D)
    e_rows = id_embeds.reshape(B * M, D).astype(dtype)
    dst_rows = dst.reshape(B * M)

    # ---- tile selection: sublane-aligned, minimal padding, >=2 grid steps so
    #      both v7x TensorCores get work when there is enough data ----
    rows = B * M
    sub = 16 if dtype == jnp.bfloat16 else 8
    n_tiles = pl.cdiv(rows, max_tile_tokens)
    if rows >= 2 * sub:
        n_tiles = max(n_tiles, 2)
    T = _round_up(pl.cdiv(rows, n_tiles), sub)        # pad <= sub-1 rows / tile
    grid_n = pl.cdiv(rows, T)
    n_pad = grid_n * T
    if n_pad != rows:
        p_rows = jnp.pad(p_rows, ((0, n_pad - rows), (0, 0)))
        e_rows = jnp.pad(e_rows, ((0, n_pad - rows), (0, 0)))
        dst_rows = jnp.pad(dst_rows, (0, n_pad - rows), constant_values=-1)

    # ---- weights: bf16 MXU operands (f32 accumulation) unless disabled ----
    mm_dtype = (jnp.bfloat16 if (use_bf16_matmul or dtype == jnp.bfloat16)
                else jnp.float32)
    # TODO(synk): fp8 weights (per-tensor scale) would halve weight VMEM and
    # roughly double MXU rate on v7x; needs numerics validation.
    w11p = params["w11"][:D].astype(mm_dtype)
    w11e = params["w11"][D:].astype(mm_dtype)
    w12 = params["w12"].astype(mm_dtype)
    w21 = params["w21"].astype(mm_dtype)
    w22 = params["w22"].astype(mm_dtype)
    # All 12 per-channel vectors packed into one resident (12, D) block.
    vecs = jnp.concatenate([
        params["ln1_g"][:, :D], params["ln1_g"][:, D:],
        params["ln1_b"][:, :D], params["ln1_b"][:, D:],
        params["b11"], params["b12"],
        params["ln2_g"], params["ln2_b"],
        params["b21"], params["b22"],
        params["ln3_g"], params["ln3_b"],
    ], axis=0).astype(jnp.float32)

    prompt_flat = prompt_embeds.reshape(B * S, D)

    # Resident (grid-invariant) blocks: single-buffered to halve weight VMEM.
    def _resident(shape):
        index_map = lambda i: (0, 0)
        try:
            return pl.BlockSpec(shape, index_map, pipeline_mode=pl.Buffered(1))
        except TypeError:  # older BlockSpec without pipeline_mode
            return pl.BlockSpec(shape, index_map)

    tok_spec = pl.BlockSpec((T, D), lambda i: (i, 0))
    in_specs = [
        pl.BlockSpec(memory_space=pltpu.MemorySpace.SMEM),  # 0: dst row table
        tok_spec,                                           # 1: prompt rows
        tok_spec,                                           # 2: id rows
        _resident((12, D)),                                 # 3: packed vectors
        _resident((D, D)), _resident((D, D)), _resident((D, D)),
        _resident((D, D)), _resident((D, D)),               # 4-8: weights
        pl.BlockSpec(memory_space=pl.ANY),                  # 9: aliased prompt
    ]

    # ---- VMEM budget from the actual footprint, clamped to the device cap ----
    weights = (w11p, w11e, w12, w21, w22)
    w_bytes = sum(int(w.size) * w.dtype.itemsize for w in weights)
    w_bytes += int(vecs.size) * 4
    tok_bytes = 2 * 2 * T * D * itemsize + T * D * itemsize  # dbl-buf p,e + scratch
    need = w_bytes + tok_bytes
    try:
        vmem_cap = int(pltpu.get_tpu_info().vmem_capacity_bytes)
    except Exception:
        vmem_cap = 64 * 1024 * 1024  # conservative (v7x-sized) fallback
    vmem_limit = int(min(max(2 * need + (8 << 20), 32 << 20),
                         vmem_cap - (8 << 20)))

    cost = pl.CostEstimate(
        flops=2 * 5 * n_pad * D * D,                # 5 DxD-equivalent matmuls
        transcendentals=2 * n_pad * D,              # 2 GELUs
        bytes_accessed=int(3 * rows * D * itemsize + w_bytes),
    )

    out_flat = pl.pallas_call(
        functools.partial(_fuse_kernel, approx_gelu=approx_gelu),
        out_shape=jax.ShapeDtypeStruct((B * S, D), dtype),
        grid=(grid_n,),
        in_specs=in_specs,
        out_specs=pl.BlockSpec(memory_space=pl.ANY),
        scratch_shapes=[pltpu.VMEM((T, D), dtype),
                        pltpu.SemaphoreType.DMA((1,))],
        input_output_aliases={9: 0},  # prompt_flat is the output buffer
        compiler_params=pltpu.CompilerParams(
            dimension_semantics=("parallel",),
            vmem_limit_bytes=vmem_limit,
        ),
        cost_estimate=cost,
    )(dst_rows, p_rows, e_rows, vecs, w11p, w11e, w12, w21, w22, prompt_flat)

    return out_flat.reshape(B, S, D)


# ----------------------------------------------------------------------------
# Pure-JAX reference mirroring the torch module (real concat, unsplit weights).
# ----------------------------------------------------------------------------
def fuse_module_reference(prompt_embeds, id_embeds, class_tokens_mask, params):
    B, S, D = prompt_embeds.shape
    M = id_embeds.shape[1]
    order, valid, _ = _fusion_plan(class_tokens_mask, B, S, M)

    p = jnp.take_along_axis(prompt_embeds, order[..., None], axis=1)
    p = p.reshape(B * M, D).astype(jnp.float32)
    e = id_embeds.reshape(B * M, D).astype(jnp.float32)

    def gelu(x):
        return 0.5 * x * (1.0 + jax.lax.erf(x * 0.7071067811865476))

    x = jnp.concatenate([p, e], axis=-1)
    h = _layernorm(x, params["ln1_g"], params["ln1_b"])
    h = gelu(h @ params["w11"] + params["b11"]) @ params["w12"] + params["b12"]
    fused = h + p
    r = fused
    h = _layernorm(fused, params["ln2_g"], params["ln2_b"])
    h = gelu(h @ params["w21"] + params["b21"]) @ params["w22"] + params["b22"]
    fused = _layernorm(h + r, params["ln3_g"], params["ln3_b"])
    fused = fused.astype(prompt_embeds.dtype)

    flat_idx = jnp.where(valid, order + jnp.arange(B)[:, None] * S, B * S)
    out_flat = prompt_embeds.reshape(B * S, D).at[flat_idx.reshape(-1)].set(
        fused, mode="drop")
    return out_flat.reshape(B, S, D)


if __name__ == "__main__":
    key = jax.random.PRNGKey(0)
    k_p, k_id, k_w = jax.random.split(key, 3)

    # batch, seq_len, embed_dim (lane-dense multiple of 128), max_num_inputs
    B, S, D, M = 2, 16, 128, 4

    prompt_embeds = jax.random.normal(k_p, (B, S, D), jnp.float32)
    id_embeds = jax.random.normal(k_id, (B, M, 1, D), jnp.float32)

    # deterministic class-token mask: batch 0 -> 3 class tokens, batch 1 -> 2
    mask = jnp.zeros((B, S), dtype=bool)
    mask = mask.at[0, jnp.array([2, 5, 9])].set(True)
    mask = mask.at[1, jnp.array([1, 7])].set(True)

    params = init_params(k_w, D)
    ref = fuse_module_reference(prompt_embeds, id_embeds, mask, params)

    # --- exact config (erf GELU, f32 matmul operands): structural check.
    # Tolerance is 1e-2 rather than 1e-6 only because TPU matmul operand
    # precision (XLA default vs. Mosaic) may differ at the bf16-rounding level.
    out = fuse_module_forward(prompt_embeds, id_embeds, mask, params,
                              use_bf16_matmul=False, approx_gelu=False)
    out = jax.block_until_ready(out)
    assert out.shape == (B, S, D)
    assert bool(jnp.allclose(out, ref, atol=1e-2, rtol=1e-2)), \
        "exact-config mismatch vs reference"
    # unmasked tokens must come back bit-identical (in-place row scatter)
    assert bool(jnp.array_equal(jnp.where(mask[..., None], out, prompt_embeds),
                                out))
    # masked tokens must actually have been rewritten
    assert bool(jnp.any(jnp.abs(out - prompt_embeds) > 1e-3))

    # --- performance config (bf16 MXU operands + tanh GELU): sanity check.
    out_fast = fuse_module_forward(prompt_embeds, id_embeds, mask, params,
                                   use_bf16_matmul=True, approx_gelu=True)
    out_fast = jax.block_until_ready(out_fast)
    assert bool(jnp.allclose(out_fast, ref, atol=1e-1, rtol=1e-1)), \
        "perf-config mismatch vs reference"
    assert bool(jnp.array_equal(
        jnp.where(mask[..., None], out_fast, prompt_embeds), out_fast))

    print("KERNEL_OK")
</pallas_src>

<mosaic_0001>
module attributes {stable_mosaic.version = 11 : i64} {
  func.func @_fuse_kernel(%arg0: i32, %arg1: memref<8xi32, #tpu.memory_space<smem>>, %arg2: memref<8x128xf32, #tpu.memory_space<vmem>>, %arg3: memref<8x128xf32, #tpu.memory_space<vmem>>, %arg4: memref<12x128xf32, #tpu.memory_space<vmem>>, %arg5: memref<128x128xf32, #tpu.memory_space<vmem>>, %arg6: memref<128x128xf32, #tpu.memory_space<vmem>>, %arg7: memref<128x128xf32, #tpu.memory_space<vmem>>, %arg8: memref<128x128xf32, #tpu.memory_space<vmem>>, %arg9: memref<128x128xf32, #tpu.memory_space<vmem>>, %arg10: memref<32x128xf32, #tpu.memory_space<any>>, %arg11: memref<32x128xf32, #tpu.memory_space<any>>, %arg12: memref<8x128xf32, #tpu.memory_space<vmem>>, %arg13: memref<1x!tpu.dma_semaphore, #tpu.memory_space<semaphore_mem>>) attributes {dimension_semantics = [#tpu.dimension_semantics<parallel>], iteration_bounds = array<i64: 1>, scalar_prefetch = 0 : i64, scratch_operands = 2 : i64, tpu.core_type = #tpu.core_type<tc>, window_params = [{transform_indices = @transform_0, window_bounds = array<i64: 8>}, {transform_indices = @transform_1, window_bounds = array<i64: 8, 128>}, {transform_indices = @transform_2, window_bounds = array<i64: 8, 128>}, {pipeline_mode = #tpu.pipeline_mode<synchronous>, transform_indices = @transform_3, window_bounds = array<i64: 12, 128>}, {pipeline_mode = #tpu.pipeline_mode<synchronous>, transform_indices = @transform_4, window_bounds = array<i64: 128, 128>}, {pipeline_mode = #tpu.pipeline_mode<synchronous>, transform_indices = @transform_5, window_bounds = array<i64: 128, 128>}, {pipeline_mode = #tpu.pipeline_mode<synchronous>, transform_indices = @transform_6, window_bounds = array<i64: 128, 128>}, {pipeline_mode = #tpu.pipeline_mode<synchronous>, transform_indices = @transform_7, window_bounds = array<i64: 128, 128>}, {pipeline_mode = #tpu.pipeline_mode<synchronous>, transform_indices = @transform_8, window_bounds = array<i64: 128, 128>}, {}, {}]} {
    %c0 = arith.constant 0 : index
    %c0_0 = arith.constant 0 : index
    %0 = vector.load %arg2[%c0, %c0_0] : memref<8x128xf32, #tpu.memory_space<vmem>>, vector<8x128xf32>
    %c0_1 = arith.constant 0 : index
    %c0_2 = arith.constant 0 : index
    %1 = vector.load %arg3[%c0_1, %c0_2] : memref<8x128xf32, #tpu.memory_space<vmem>>, vector<8x128xf32>
    %c0_3 = arith.constant 0 : index
    %c0_4 = arith.constant 0 : index
    %2 = vector.load %arg4[%c0_3, %c0_4] : memref<12x128xf32, #tpu.memory_space<vmem>>, vector<12x128xf32>
    %3 = vector.extract_strided_slice %2 {offsets = [0, 0], sizes = [1, 128], strides = [1, 1]} : vector<12x128xf32> to vector<1x128xf32>
    %4 = vector.extract_strided_slice %2 {offsets = [1, 0], sizes = [1, 128], strides = [1, 1]} : vector<12x128xf32> to vector<1x128xf32>
    %5 = vector.extract_strided_slice %2 {offsets = [2, 0], sizes = [1, 128], strides = [1, 1]} : vector<12x128xf32> to vector<1x128xf32>
    %6 = vector.extract_strided_slice %2 {offsets = [3, 0], sizes = [1, 128], strides = [1, 1]} : vector<12x128xf32> to vector<1x128xf32>
    %7 = vector.extract_strided_slice %2 {offsets = [4, 0], sizes = [1, 128], strides = [1, 1]} : vector<12x128xf32> to vector<1x128xf32>
    %8 = vector.extract_strided_slice %2 {offsets = [5, 0], sizes = [1, 128], strides = [1, 1]} : vector<12x128xf32> to vector<1x128xf32>
    %9 = vector.extract_strided_slice %2 {offsets = [6, 0], sizes = [1, 128], strides = [1, 1]} : vector<12x128xf32> to vector<1x128xf32>
    %10 = vector.extract_strided_slice %2 {offsets = [7, 0], sizes = [1, 128], strides = [1, 1]} : vector<12x128xf32> to vector<1x128xf32>
    %11 = vector.extract_strided_slice %2 {offsets = [8, 0], sizes = [1, 128], strides = [1, 1]} : vector<12x128xf32> to vector<1x128xf32>
    %12 = vector.extract_strided_slice %2 {offsets = [9, 0], sizes = [1, 128], strides = [1, 1]} : vector<12x128xf32> to vector<1x128xf32>
    %13 = vector.extract_strided_slice %2 {offsets = [10, 0], sizes = [1, 128], strides = [1, 1]} : vector<12x128xf32> to vector<1x128xf32>
    %14 = vector.extract_strided_slice %2 {offsets = [11, 0], sizes = [1, 128], strides = [1, 1]} : vector<12x128xf32> to vector<1x128xf32>
    %cst = arith.constant dense<0.000000e+00> : vector<8xf32>
    %15 = vector.multi_reduction <add>, %0, %cst [1] : vector<8x128xf32> to vector<8xf32>
    %16 = vector.shape_cast %15 : vector<8xf32> to vector<8x1xf32>
    %cst_5 = arith.constant 1.280000e+02 : f32
    %17 = vector.broadcast %cst_5 : f32 to vector<8x1xf32>
    %18 = arith.divf %16, %17 : vector<8x1xf32>
    %cst_6 = arith.constant dense<0.000000e+00> : vector<8xf32>
    %19 = vector.multi_reduction <add>, %1, %cst_6 [1] : vector<8x128xf32> to vector<8xf32>
    %20 = vector.shape_cast %19 : vector<8xf32> to vector<8x1xf32>
    %cst_7 = arith.constant 1.280000e+02 : f32
    %21 = vector.broadcast %cst_7 : f32 to vector<8x1xf32>
    %22 = arith.divf %20, %21 : vector<8x1xf32>
    %23 = arith.addf %18, %22 : vector<8x1xf32>
    %cst_8 = arith.constant 5.000000e-01 : f32
    %24 = vector.broadcast %cst_8 : f32 to vector<8x1xf32>
    %25 = arith.mulf %24, %23 : vector<8x1xf32>
    %26 = vector.broadcast %25 : vector<8x1xf32> to vector<8x128xf32>
    %27 = arith.subf %0, %26 : vector<8x128xf32>
    %28 = arith.mulf %27, %27 : vector<8x128xf32>
    %cst_9 = arith.constant dense<0.000000e+00> : vector<8xf32>
    %29 = vector.multi_reduction <add>, %28, %cst_9 [1] : vector<8x128xf32> to vector<8xf32>
    %30 = vector.shape_cast %29 : vector<8xf32> to vector<8x1xf32>
    %cst_10 = arith.constant 1.280000e+02 : f32
    %31 = vector.broadcast %cst_10 : f32 to vector<8x1xf32>
    %32 = arith.divf %30, %31 : vector<8x1xf32>
    %33 = vector.broadcast %25 : vector<8x1xf32> to vector<8x128xf32>
    %34 = arith.subf %1, %33 : vector<8x128xf32>
    %35 = arith.mulf %34, %34 : vector<8x128xf32>
    %cst_11 = arith.constant dense<0.000000e+00> : vector<8xf32>
    %36 = vector.multi_reduction <add>, %35, %cst_11 [1] : vector<8x128xf32> to vector<8xf32>
    %37 = vector.shape_cast %36 : vector<8xf32> to vector<8x1xf32>
    %cst_12 = arith.constant 1.280000e+02 : f32
    %38 = vector.broadcast %cst_12 : f32 to vector<8x1xf32>
    %39 = arith.divf %37, %38 : vector<8x1xf32>
    %40 = arith.addf %32, %39 : vector<8x1xf32>
    %cst_13 = arith.constant 5.000000e-01 : f32
    %41 = vector.broadcast %cst_13 : f32 to vector<8x1xf32>
    %42 = arith.mulf %41, %40 : vector<8x1xf32>
    %cst_14 = arith.constant 9.99999974E-6 : f32
    %43 = vector.broadcast %cst_14 : f32 to vector<8x1xf32>
    %44 = arith.addf %42, %43 : vector<8x1xf32>
    %45 = math.rsqrt %44 : vector<8x1xf32>
    %46 = vector.broadcast %25 : vector<8x1xf32> to vector<8x128xf32>
    %47 = arith.subf %0, %46 : vector<8x128xf32>
    %48 = vector.broadcast %45 : vector<8x1xf32> to vector<8x128xf32>
    %49 = arith.mulf %47, %48 : vector<8x128xf32>
    %50 = vector.broadcast %3 : vector<1x128xf32> to vector<8x128xf32>
    %51 = arith.mulf %49, %50 : vector<8x128xf32>
    %52 = vector.broadcast %5 : vector<1x128xf32> to vector<8x128xf32>
    %53 = arith.addf %51, %52 : vector<8x128xf32>
    %54 = vector.broadcast %25 : vector<8x1xf32> to vector<8x128xf32>
    %55 = arith.subf %1, %54 : vector<8x128xf32>
    %56 = vector.broadcast %45 : vector<8x1xf32> to vector<8x128xf32>
    %57 = arith.mulf %55, %56 : vector<8x128xf32>
    %58 = vector.broadcast %4 : vector<1x128xf32> to vector<8x128xf32>
    %59 = arith.mulf %57, %58 : vector<8x128xf32>
    %60 = vector.broadcast %6 : vector<1x128xf32> to vector<8x128xf32>
    %61 = arith.addf %59, %60 : vector<8x128xf32>
    %c0_15 = arith.constant 0 : index
    %c0_16 = arith.constant 0 : index
    %62 = vector.load %arg5[%c0_15, %c0_16] : memref<128x128xf32, #tpu.memory_space<vmem>>, vector<128x128xf32>
    %cst_17 = arith.constant dense<0.000000e+00> : vector<8x128xf32>
    %63 = tpu.matmul %53, %62, %cst_17 {dimension_numbers = #tpu.dot_dimension_numbers<[1], [0], [0], [1], [0, 0, 1, 1], [], []>} : vector<8x128xf32>, vector<128x128xf32>, vector<8x128xf32> -> vector<8x128xf32>
    %c0_18 = arith.constant 0 : index
    %c0_19 = arith.constant 0 : index
    %64 = vector.load %arg6[%c0_18, %c0_19] : memref<128x128xf32, #tpu.memory_space<vmem>>, vector<128x128xf32>
    %cst_20 = arith.constant dense<0.000000e+00> : vector<8x128xf32>
    %65 = tpu.matmul %61, %64, %cst_20 {dimension_numbers = #tpu.dot_dimension_numbers<[1], [0], [0], [1], [0, 0, 1, 1], [], []>} : vector<8x128xf32>, vector<128x128xf32>, vector<8x128xf32> -> vector<8x128xf32>
    %66 = arith.addf %63, %65 : vector<8x128xf32>
    %67 = vector.broadcast %7 : vector<1x128xf32> to vector<8x128xf32>
    %68 = arith.addf %66, %67 : vector<8x128xf32>
    %cst_21 = arith.constant 5.000000e-01 : f32
    %69 = vector.broadcast %cst_21 : f32 to vector<8x128xf32>
    %70 = arith.mulf %69, %68 : vector<8x128xf32>
    %cst_22 = arith.constant 0.707106769 : f32
    %71 = vector.broadcast %cst_22 : f32 to vector<8x128xf32>
    %72 = arith.mulf %68, %71 : vector<8x128xf32>
    %cst_23 = arith.constant 0.000000e+00 : f32
    %73 = vector.broadcast %cst_23 : f32 to vector<8x128xf32>
    %74 = arith.cmpf oge, %72, %73 : vector<8x128xf32>
    %cst_24 = arith.constant 0.000000e+00 : f32
    %75 = vector.broadcast %cst_24 : f32 to vector<8x128xf32>
    %76 = arith.subf %75, %72 : vector<8x128xf32>
    %77 = arith.select %74, %72, %76 : vector<8x128xi1>, vector<8x128xf32>
    %cst_25 = arith.constant 0.327591091 : f32
    %78 = vector.broadcast %cst_25 : f32 to vector<8x128xf32>
    %79 = arith.mulf %78, %77 : vector<8x128xf32>
    %cst_26 = arith.constant 1.000000e+00 : f32
    %80 = vector.broadcast %cst_26 : f32 to vector<8x128xf32>
    %81 = arith.addf %80, %79 : vector<8x128xf32>
    %cst_27 = arith.constant 1.000000e+00 : f32
    %82 = vector.broadcast %cst_27 : f32 to vector<8x128xf32>
    %83 = arith.divf %82, %81 : vector<8x128xf32>
    %cst_28 = arith.constant 1.06140542 : f32
    %84 = vector.broadcast %cst_28 : f32 to vector<8x128xf32>
    %85 = arith.mulf %84, %83 : vector<8x128xf32>
    %cst_29 = arith.constant -1.45315206 : f32
    %86 = vector.broadcast %cst_29 : f32 to vector<8x128xf32>
    %87 = arith.addf %85, %86 : vector<8x128xf32>
    %88 = arith.mulf %87, %83 : vector<8x128xf32>
    %cst_30 = arith.constant 1.42141378 : f32
    %89 = vector.broadcast %cst_30 : f32 to vector<8x128xf32>
    %90 = arith.addf %88, %89 : vector<8x128xf32>
    %91 = arith.mulf %90, %83 : vector<8x128xf32>
    %cst_31 = arith.constant -0.284496725 : f32
    %92 = vector.broadcast %cst_31 : f32 to vector<8x128xf32>
    %93 = arith.addf %91, %92 : vector<8x128xf32>
    %94 = arith.mulf %93, %83 : vector<8x128xf32>
    %cst_32 = arith.constant 0.254829586 : f32
    %95 = vector.broadcast %cst_32 : f32 to vector<8x128xf32>
    %96 = arith.addf %94, %95 : vector<8x128xf32>
    %97 = arith.mulf %96, %83 : vector<8x128xf32>
    %cst_33 = arith.constant 0.000000e+00 : f32
    %98 = vector.broadcast %cst_33 : f32 to vector<8x128xf32>
    %99 = arith.subf %98, %77 : vector<8x128xf32>
    %100 = arith.mulf %99, %77 : vector<8x128xf32>
    %101 = math.exp %100 : vector<8x128xf32>
    %102 = arith.mulf %97, %101 : vector<8x128xf32>
    %cst_34 = arith.constant 1.000000e+00 : f32
    %103 = vector.broadcast %cst_34 : f32 to vector<8x128xf32>
    %104 = arith.subf %103, %102 : vector<8x128xf32>
    %cst_35 = arith.constant 0.000000e+00 : f32
    %105 = vector.broadcast %cst_35 : f32 to vector<8x128xf32>
    %106 = arith.cmpf oge, %72, %105 : vector<8x128xf32>
    %cst_36 = arith.constant 0.000000e+00 : f32
    %107 = vector.broadcast %cst_36 : f32 to vector<8x128xf32>
    %108 = arith.subf %107, %104 : vector<8x128xf32>
    %109 = arith.select %106, %104, %108 : vector<8x128xi1>, vector<8x128xf32>
    %cst_37 = arith.constant 1.000000e+00 : f32
    %110 = vector.broadcast %cst_37 : f32 to vector<8x128xf32>
    %111 = arith.addf %110, %109 : vector<8x128xf32>
    %112 = arith.mulf %70, %111 : vector<8x128xf32>
    %c0_38 = arith.constant 0 : index
    %c0_39 = arith.constant 0 : index
    %113 = vector.load %arg7[%c0_38, %c0_39] : memref<128x128xf32, #tpu.memory_space<vmem>>, vector<128x128xf32>
    %cst_40 = arith.constant dense<0.000000e+00> : vector<8x128xf32>
    %114 = tpu.matmul %112, %113, %cst_40 {dimension_numbers = #tpu.dot_dimension_numbers<[1], [0], [0], [1], [0, 0, 1, 1], [], []>} : vector<8x128xf32>, vector<128x128xf32>, vector<8x128xf32> -> vector<8x128xf32>
    %115 = vector.broadcast %8 : vector<1x128xf32> to vector<8x128xf32>
    %116 = arith.addf %114, %115 : vector<8x128xf32>
    %117 = arith.addf %116, %0 : vector<8x128xf32>
    %cst_41 = arith.constant dense<0.000000e+00> : vector<8xf32>
    %118 = vector.multi_reduction <add>, %117, %cst_41 [1] : vector<8x128xf32> to vector<8xf32>
    %119 = vector.shape_cast %118 : vector<8xf32> to vector<8x1xf32>
    %cst_42 = arith.constant 1.280000e+02 : f32
    %120 = vector.broadcast %cst_42 : f32 to vector<8x1xf32>
    %121 = arith.divf %119, %120 : vector<8x1xf32>
    %122 = vector.broadcast %121 : vector<8x1xf32> to vector<8x128xf32>
    %123 = arith.subf %117, %122 : vector<8x128xf32>
    %124 = arith.mulf %123, %123 : vector<8x128xf32>
    %cst_43 = arith.constant dense<0.000000e+00> : vector<8xf32>
    %125 = vector.multi_reduction <add>, %124, %cst_43 [1] : vector<8x128xf32> to vector<8xf32>
    %126 = vector.shape_cast %125 : vector<8xf32> to vector<8x1xf32>
    %cst_44 = arith.constant 1.280000e+02 : f32
    %127 = vector.broadcast %cst_44 : f32 to vector<8x1xf32>
    %128 = arith.divf %126, %127 : vector<8x1xf32>
    %129 = vector.broadcast %121 : vector<8x1xf32> to vector<8x128xf32>
    %130 = arith.subf %117, %129 : vector<8x128xf32>
    %cst_45 = arith.constant 9.99999974E-6 : f32
    %131 = vector.broadcast %cst_45 : f32 to vector<8x1xf32>
    %132 = arith.addf %128, %131 : vector<8x1xf32>
    %133 = math.rsqrt %132 : vector<8x1xf32>
    %134 = vector.broadcast %133 : vector<8x1xf32> to vector<8x128xf32>
    %135 = arith.mulf %130, %134 : vector<8x128xf32>
    %136 = vector.broadcast %9 : vector<1x128xf32> to vector<8x128xf32>
    %137 = arith.mulf %135, %136 : vector<8x128xf32>
    %138 = vector.broadcast %10 : vector<1x128xf32> to vector<8x128xf32>
    %139 = arith.addf %137, %138 : vector<8x128xf32>
    %c0_46 = arith.constant 0 : index
    %c0_47 = arith.constant 0 : index
    %140 = vector.load %arg8[%c0_46, %c0_47] : memref<128x128xf32, #tpu.memory_space<vmem>>, vector<128x128xf32>
    %cst_48 = arith.constant dense<0.000000e+00> : vector<8x128xf32>
    %141 = tpu.matmul %139, %140, %cst_48 {dimension_numbers = #tpu.dot_dimension_numbers<[1], [0], [0], [1], [0, 0, 1, 1], [], []>} : vector<8x128xf32>, vector<128x128xf32>, vector<8x128xf32> -> vector<8x128xf32>
    %142 = vector.broadcast %11 : vector<1x128xf32> to vector<8x128xf32>
    %143 = arith.addf %141, %142 : vector<8x128xf32>
    %cst_49 = arith.constant 5.000000e-01 : f32
    %144 = vector.broadcast %cst_49 : f32 to vector<8x128xf32>
    %145 = arith.mulf %144, %143 : vector<8x128xf32>
    %cst_50 = arith.constant 0.707106769 : f32
    %146 = vector.broadcast %cst_50 : f32 to vector<8x128xf32>
    %147 = arith.mulf %143, %146 : vector<8x128xf32>
    %cst_51 = arith.constant 0.000000e+00 : f32
    %148 = vector.broadcast %cst_51 : f32 to vector<8x128xf32>
    %149 = arith.cmpf oge, %147, %148 : vector<8x128xf32>
    %cst_52 = arith.constant 0.000000e+00 : f32
    %150 = vector.broadcast %cst_52 : f32 to vector<8x128xf32>
    %151 = arith.subf %150, %147 : vector<8x128xf32>
    %152 = arith.select %149, %147, %151 : vector<8x128xi1>, vector<8x128xf32>
    %cst_53 = arith.constant 0.327591091 : f32
    %153 = vector.broadcast %cst_53 : f32 to vector<8x128xf32>
    %154 = arith.mulf %153, %152 : vector<8x128xf32>
    %cst_54 = arith.constant 1.000000e+00 : f32
    %155 = vector.broadcast %cst_54 : f32 to vector<8x128xf32>
    %156 = arith.addf %155, %154 : vector<8x128xf32>
    %cst_55 = arith.constant 1.000000e+00 : f32
    %157 = vector.broadcast %cst_55 : f32 to vector<8x128xf32>
    %158 = arith.divf %157, %156 : vector<8x128xf32>
    %cst_56 = arith.constant 1.06140542 : f32
    %159 = vector.broadcast %cst_56 : f32 to vector<8x128xf32>
    %160 = arith.mulf %159, %158 : vector<8x128xf32>
    %cst_57 = arith.constant -1.45315206 : f32
    %161 = vector.broadcast %cst_57 : f32 to vector<8x128xf32>
    %162 = arith.addf %160, %161 : vector<8x128xf32>
    %163 = arith.mulf %162, %158 : vector<8x128xf32>
    %cst_58 = arith.constant 1.42141378 : f32
    %164 = vector.broadcast %cst_58 : f32 to vector<8x128xf32>
    %165 = arith.addf %163, %164 : vector<8x128xf32>
    %166 = arith.mulf %165, %158 : vector<8x128xf32>
    %cst_59 = arith.constant -0.284496725 : f32
    %167 = vector.broadcast %cst_59 : f32 to vector<8x128xf32>
    %168 = arith.addf %166, %167 : vector<8x128xf32>
    %169 = arith.mulf %168, %158 : vector<8x128xf32>
    %cst_60 = arith.constant 0.254829586 : f32
    %170 = vector.broadcast %cst_60 : f32 to vector<8x128xf32>
    %171 = arith.addf %169, %170 : vector<8x128xf32>
    %172 = arith.mulf %171, %158 : vector<8x128xf32>
    %cst_61 = arith.constant 0.000000e+00 : f32
    %173 = vector.broadcast %cst_61 : f32 to vector<8x128xf32>
    %174 = arith.subf %173, %152 : vector<8x128xf32>
    %175 = arith.mulf %174, %152 : vector<8x128xf32>
    %176 = math.exp %175 : vector<8x128xf32>
    %177 = arith.mulf %172, %176 : vector<8x128xf32>
    %cst_62 = arith.constant 1.000000e+00 : f32
    %178 = vector.broadcast %cst_62 : f32 to vector<8x128xf32>
    %179 = arith.subf %178, %177 : vector<8x128xf32>
    %cst_63 = arith.constant 0.000000e+00 : f32
    %180 = vector.broadcast %cst_63 : f32 to vector<8x128xf32>
    %181 = arith.cmpf oge, %147, %180 : vector<8x128xf32>
    %cst_64 = arith.constant 0.000000e+00 : f32
    %182 = vector.broadcast %cst_64 : f32 to vector<8x128xf32>
    %183 = arith.subf %182, %179 : vector<8x128xf32>
    %184 = arith.select %181, %179, %183 : vector<8x128xi1>, vector<8x128xf32>
    %cst_65 = arith.constant 1.000000e+00 : f32
    %185 = vector.broadcast %cst_65 : f32 to vector<8x128xf32>
    %186 = arith.addf %185, %184 : vector<8x128xf32>
    %187 = arith.mulf %145, %186 : vector<8x128xf32>
    %c0_66 = arith.constant 0 : index
    %c0_67 = arith.constant 0 : index
    %188 = vector.load %arg9[%c0_66, %c0_67] : memref<128x128xf32, #tpu.memory_space<vmem>>, vector<128x128xf32>
    %cst_68 = arith.constant dense<0.000000e+00> : vector<8x128xf32>
    %189 = tpu.matmul %187, %188, %cst_68 {dimension_numbers = #tpu.dot_dimension_numbers<[1], [0], [0], [1], [0, 0, 1, 1], [], []>} : vector<8x128xf32>, vector<128x128xf32>, vector<8x128xf32> -> vector<8x128xf32>
    %190 = vector.broadcast %12 : vector<1x128xf32> to vector<8x128xf32>
    %191 = arith.addf %189, %190 : vector<8x128xf32>
    %192 = arith.addf %117, %191 : vector<8x128xf32>
    %cst_69 = arith.constant dense<0.000000e+00> : vector<8xf32>
    %193 = vector.multi_reduction <add>, %192, %cst_69 [1] : vector<8x128xf32> to vector<8xf32>
    %194 = vector.shape_cast %193 : vector<8xf32> to vector<8x1xf32>
    %cst_70 = arith.constant 1.280000e+02 : f32
    %195 = vector.broadcast %cst_70 : f32 to vector<8x1xf32>
    %196 = arith.divf %194, %195 : vector<8x1xf32>
    %197 = vector.broadcast %196 : vector<8x1xf32> to vector<8x128xf32>
    %198 = arith.subf %192, %197 : vector<8x128xf32>
    %199 = arith.mulf %198, %198 : vector<8x128xf32>
    %cst_71 = arith.constant dense<0.000000e+00> : vector<8xf32>
    %200 = vector.multi_reduction <add>, %199, %cst_71 [1] : vector<8x128xf32> to vector<8xf32>
    %201 = vector.shape_cast %200 : vector<8xf32> to vector<8x1xf32>
    %cst_72 = arith.constant 1.280000e+02 : f32
    %202 = vector.broadcast %cst_72 : f32 to vector<8x1xf32>
    %203 = arith.divf %201, %202 : vector<8x1xf32>
    %204 = vector.broadcast %196 : vector<8x1xf32> to vector<8x128xf32>
    %205 = arith.subf %192, %204 : vector<8x128xf32>
    %cst_73 = arith.constant 9.99999974E-6 : f32
    %206 = vector.broadcast %cst_73 : f32 to vector<8x1xf32>
    %207 = arith.addf %203, %206 : vector<8x1xf32>
    %208 = math.rsqrt %207 : vector<8x1xf32>
    %209 = vector.broadcast %208 : vector<8x1xf32> to vector<8x128xf32>
    %210 = arith.mulf %205, %209 : vector<8x128xf32>
    %211 = vector.broadcast %13 : vector<1x128xf32> to vector<8x128xf32>
    %212 = arith.mulf %210, %211 : vector<8x128xf32>
    %213 = vector.broadcast %14 : vector<1x128xf32> to vector<8x128xf32>
    %214 = arith.addf %212, %213 : vector<8x128xf32>
    %c0_74 = arith.constant 0 : index
    %c0_75 = arith.constant 0 : index
    %215 = vector.load %arg12[%c0_74, %c0_75] : memref<8x128xf32, #tpu.memory_space<vmem>>, vector<8x128xf32>
    tpu.vector_store %arg12[%c0_74, %c0_75], %214 {strides = array<i32>} : memref<8x128xf32, #tpu.memory_space<vmem>>, vector<8x128xf32>,
    %c8_i32 = arith.constant 8 : i32
    %216 = arith.muli %arg0, %c8_i32 : i32
    %c0_i32 = arith.constant 0 : i32
    %c8_i32_76 = arith.constant 8 : i32
    %217 = arith.addi %c0_i32, %c8_i32_76 : i32
    %c1_i32 = arith.constant 1 : i32
    scf.for %arg14 = %c0_i32 to %217 step %c1_i32  : i32 {
      %c1_i32_82 = arith.constant 1 : i32
      %219 = arith.muli %arg14, %c1_i32_82 : i32
      %c0_i32_83 = arith.constant 0 : i32
      %220 = arith.addi %c0_i32_83, %219 : i32
      %221 = arith.addi %216, %220 : i32
      %222 = arith.index_cast %221 : i32 to index
      %223 = memref.load %arg1[%222] : memref<8xi32, #tpu.memory_space<smem>>
      %c0_i32_84 = arith.constant 0 : i32
      %224 = arith.cmpi sge, %223, %c0_i32_84 : i32
      %225 = arith.extui %224 : i1 to i32
      %c0_i32_85 = arith.constant 0 : i32
      %226 = arith.cmpi ne, %225, %c0_i32_85 : i32
      scf.if %226 {
        %c0_i32_86 = arith.constant 0 : i32
        %c0_i32_87 = arith.constant 0 : i32
        %227 = tpu.memref_slice %arg12[%220, %c0_i32_87] : memref<8x128xf32, #tpu.memory_space<vmem>> -> memref<1x128xf32, #tpu.memory_space<vmem>>
        %c0_i32_88 = arith.constant 0 : i32
        %228 = tpu.memref_slice %arg11[%223, %c0_i32_88] : memref<32x128xf32, #tpu.memory_space<any>> -> memref<1x128xf32, #tpu.memory_space<any>>
        %229 = tpu.memref_slice %arg13[%c0_i32_86] : memref<1x!tpu.dma_semaphore, #tpu.memory_space<semaphore_mem>> -> memref<1x!tpu.dma_semaphore, #tpu.memory_space<semaphore_mem>>
        %230 = tpu.memref_squeeze %229 : memref<1x!tpu.dma_semaphore, #tpu.memory_space<semaphore_mem>> -> memref<!tpu.dma_semaphore, #tpu.memory_space<semaphore_mem>>
        tpu.enqueue_dma source(%227 : memref<1x128xf32, #tpu.memory_space<vmem>>) target(%228 : memref<1x128xf32, #tpu.memory_space<any>>) target_semaphore(%230 : memref<!tpu.dma_semaphore, #tpu.memory_space<semaphore_mem>>)
      } else {
      }
    }
    %c8_i32_77 = arith.constant 8 : i32
    %c0_i32_78 = arith.constant 0 : i32
    %c8_i32_79 = arith.constant 8 : i32
    %218 = arith.addi %c0_i32_78, %c8_i32_79 : i32
    %c1_i32_80 = arith.constant 1 : i32
    scf.for %arg14 = %c0_i32_78 to %218 step %c1_i32_80  : i32 {
      %c1_i32_82 = arith.constant 1 : i32
      %219 = arith.muli %arg14, %c1_i32_82 : i32
      %c0_i32_83 = arith.constant 0 : i32
      %220 = arith.addi %c0_i32_83, %219 : i32
      %221 = arith.addi %216, %220 : i32
      %222 = arith.index_cast %221 : i32 to index
      %223 = memref.load %arg1[%222] : memref<8xi32, #tpu.memory_space<smem>>
      %c0_i32_84 = arith.constant 0 : i32
      %224 = arith.cmpi sge, %223, %c0_i32_84 : i32
      %225 = arith.extui %224 : i1 to i32
      %c0_i32_85 = arith.constant 0 : i32
      %226 = arith.cmpi ne, %225, %c0_i32_85 : i32
      scf.if %226 {
        %c0_i32_86 = arith.constant 0 : i32
        %c0_i32_87 = arith.constant 0 : i32
        %227 = tpu.memref_slice %arg12[%220, %c0_i32_87] : memref<8x128xf32, #tpu.memory_space<vmem>> -> memref<1x128xf32, #tpu.memory_space<vmem>>
        %c0_i32_88 = arith.constant 0 : i32
        %228 = tpu.memref_slice %arg11[%223, %c0_i32_88] : memref<32x128xf32, #tpu.memory_space<any>> -> memref<1x128xf32, #tpu.memory_space<any>>
        %229 = tpu.memref_slice %arg13[%c0_i32_86] : memref<1x!tpu.dma_semaphore, #tpu.memory_space<semaphore_mem>> -> memref<1x!tpu.dma_semaphore, #tpu.memory_space<semaphore_mem>>
        %230 = tpu.memref_squeeze %229 : memref<1x!tpu.dma_semaphore, #tpu.memory_space<semaphore_mem>> -> memref<!tpu.dma_semaphore, #tpu.memory_space<semaphore_mem>>
        tpu.wait_dma2 semaphore(%230 : memref<!tpu.dma_semaphore, #tpu.memory_space<semaphore_mem>>) src(%227 : memref<1x128xf32, #tpu.memory_space<vmem>>) dst(%228 : memref<1x128xf32, #tpu.memory_space<any>>)
      } else {
      }
    }
    %c8_i32_81 = arith.constant 8 : i32
    return
  }
  func.func @transform_0(%arg0: i32) -> i32 {
    %c0_i32 = arith.constant 0 : i32
    %c0_i32_0 = arith.constant 0 : i32
    return %c0_i32 : i32
  }
  func.func @transform_1(%arg0: i32) -> (i32, i32) {
    %c0_i32 = arith.constant 0 : i32
    %c0_i32_0 = arith.constant 0 : i32
    return %arg0, %c0_i32 : i32, i32
  }
  func.func @transform_2(%arg0: i32) -> (i32, i32) {
    %c0_i32 = arith.constant 0 : i32
    %c0_i32_0 = arith.constant 0 : i32
    return %arg0, %c0_i32 : i32, i32
  }
  func.func @transform_3(%arg0: i32) -> (i32, i32) {
    %c0_i32 = arith.constant 0 : i32
    %c0_i32_0 = arith.constant 0 : i32
    %c0_i32_1 = arith.constant 0 : i32
    return %c0_i32, %c0_i32_0 : i32, i32
  }
  func.func @transform_4(%arg0: i32) -> (i32, i32) {
    %c0_i32 = arith.constant 0 : i32
    %c0_i32_0 = arith.constant 0 : i32
    %c0_i32_1 = arith.constant 0 : i32
    return %c0_i32, %c0_i32_0 : i32, i32
  }
  func.func @transform_5(%arg0: i32) -> (i32, i32) {
    %c0_i32 = arith.constant 0 : i32
    %c0_i32_0 = arith.constant 0 : i32
    %c0_i32_1 = arith.constant 0 : i32
    return %c0_i32, %c0_i32_0 : i32, i32
  }
  func.func @transform_6(%arg0: i32) -> (i32, i32) {
    %c0_i32 = arith.constant 0 : i32
    %c0_i32_0 = arith.constant 0 : i32
    %c0_i32_1 = arith.constant 0 : i32
    return %c0_i32, %c0_i32_0 : i32, i32
  }
  func.func @transform_7(%arg0: i32) -> (i32, i32) {
    %c0_i32 = arith.constant 0 : i32
    %c0_i32_0 = arith.constant 0 : i32
    %c0_i32_1 = arith.constant 0 : i32
    return %c0_i32, %c0_i32_0 : i32, i32
  }
  func.func @transform_8(%arg0: i32) -> (i32, i32) {
    %c0_i32 = arith.constant 0 : i32
    %c0_i32_0 = arith.constant 0 : i32
    %c0_i32_1 = arith.constant 0 : i32
    return %c0_i32, %c0_i32_0 : i32, i32
  }
}

</mosaic_0001>

<llo_original>
// kernel: tpu_custom_call.1
$region0: #{tpu_custom_call.1}
  #allocation0 [shape = 'u32[]', space=smem, size = 0x4, offset = 0x4, fixed_abs, tag = 'smem constant byte address 0x4 - core index']
  #allocation1 [shape = 'u32[72,128]{1,0:T(1,128)}', space=vmem, size = 0x9000, scoped, tag = 'internal scratch']
  #allocation2 [shape = 'f32[8,128]{1,0:T(8,128)}', space=vmem, size = 0x1000, scoped, tag = 'scratch operand']
  #allocation3 [shape = 's32[1]{0}', space=sflag, size = 0x4, scoped, tag = 'scratch operand']
  #allocation14 [shape = 's32[]', space=sflag, size = 0x4, offset = 0, fixed_abs, tag = 'sflag constant byte address 0x0 - dummy sync flag']
  #allocation15 [shape = 's32[]', space=sflag, size = 0x4, offset = 0, fixed_abs, tag = 'sflag constant byte address 0x0 - dummy sync flag']
  #allocation16 [shape = 'u32[]', space=smem, size = 0x4, offset = 0x44, fixed_abs, tag = 'smem constant byte address 0x44 - assertion arg 0']
  #allocation17 [shape = 'u32[]', space=smem, size = 0x4, offset = 0x48, fixed_abs, tag = 'smem constant byte address 0x48 - assertion arg 1']
  %s0 = inlined_call_operand.vmem [shape: s32[8], index: 0, kind: input, shape index: {}]
  %s1 = inlined_call_operand.vmem [shape: f32[8,128], index: 1, kind: input, shape index: {}]
  %s2 = inlined_call_operand.vmem [shape: f32[8,128], index: 2, kind: input, shape index: {}]
  %s3 = inlined_call_operand.vmem [shape: f32[12,128], index: 3, kind: input, shape index: {}]
  %s4 = inlined_call_operand.hbm [shape: f32[128,128], index: 4, kind: input, shape index: {}]
  %s5 = inlined_call_operand.hbm [shape: f32[128,128], index: 5, kind: input, shape index: {}]
  %s6 = inlined_call_operand.hbm [shape: f32[128,128], index: 6, kind: input, shape index: {}]
  %s7 = inlined_call_operand.hbm [shape: f32[128,128], index: 7, kind: input, shape index: {}]
  %s8 = inlined_call_operand.hbm [shape: f32[128,128], index: 8, kind: input, shape index: {}]
  %s9 = inlined_call_operand.hbm [shape: f32[32,128], index: 9, kind: input, shape index: {}, may-alias: {9,10}]
  %s10 = inlined_call_operand.hbm [shape: f32[32,128], index: 10, kind: output, shape index: {}, may-alias: {9,10}]
  %s11 = sld [smem:[#allocation0]]
  $region88: #{tpu_custom_call.1} parent=0
    _
  %s13 = ssub.s32 1, %s11
  %s14 = scalar_select 0, %s13, %s11
  $region1: #{tpu_custom_call.1} parent=0
    #allocation4 [shape = 'u8[512]{0}', space=smem, size = 0x200, scoped, tag = 'input window, operand 0, single buffered']
    #allocation5 [shape = 's32[1]{0}', space=sflag, size = 0x4, scoped, tag = 'scoped memory for tpu_custom_call.1']
    #allocation6 [shape = 's32[1]{0}', space=sflag, size = 0x4, scoped, tag = 'scoped memory for tpu_custom_call.1']
    #allocation7 [shape = 'u8[65536]{0}', space=vmem, size = 0x10000, scoped, tag = 'input window, operand 4, single buffered']
    #allocation8 [shape = 'u8[65536]{0}', space=vmem, size = 0x10000, scoped, tag = 'input window, operand 5, single buffered']
    #allocation9 [shape = 's32[1]{0}', space=sflag, size = 0x4, scoped, tag = 'scoped memory for tpu_custom_call.1']
    #allocation10 [shape = 'u8[65536]{0}', space=vmem, size = 0x10000, scoped, tag = 'input window, operand 6, single buffered']
    #allocation11 [shape = 'u8[65536]{0}', space=vmem, size = 0x10000, scoped, tag = 'input window, operand 7, single buffered']
    #allocation12 [shape = 's32[1]{0}', space=sflag, size = 0x4, scoped, tag = 'scoped memory for tpu_custom_call.1']
    #allocation13 [shape = 'u8[65536]{0}', space=vmem, size = 0x10000, scoped, tag = 'input window, operand 8, single buffered']
    %15 = vsyncpa [#allocation6], 0
    %16 = vsyncpa [#allocation5], 0
    %17 = vsyncpa [#allocation9], 0
    %18 = vsyncpa [#allocation12], 0
    // Predicated region
    $region2: #{tpu_custom_call.1} parent=1 // pred_check
      _
    $region3: #{tpu_custom_call.1} parent=1 // pred_check_branch
      %20 = sbr.rel (0) target = $region5
    $region4: #{tpu_custom_call.1} parent=1 // pred_region
      %22 = vsyncadd [#allocation6], 0
      %s24 = sshll.u32 %s0, 4
      %s25 = int_to_ptr.vmem [resolvable:$true] %s24
      %27 = dma.vmem_to_smem %s25, 16, [#allocation4], [#allocation6]
    $region5: #{tpu_custom_call.1} parent=1 // pred_fallthru
      _
    // Predicated region
    $region6: #{tpu_custom_call.1} parent=1 // pred_check
      _
    $region7: #{tpu_custom_call.1} parent=1 // pred_check_branch
      %29 = sbr.rel (0) target = $region9
    $region8: #{tpu_custom_call.1} parent=1 // pred_region
      _
    $region9: #{tpu_custom_call.1} parent=1 // pred_fallthru
      _
    // Predicated region
    $region10: #{tpu_custom_call.1} parent=1 // pred_check
      _
    $region11: #{tpu_custom_call.1} parent=1 // pred_check_branch
      %31 = sbr.rel (0) target = $region13
    $region12: #{tpu_custom_call.1} parent=1 // pred_region
      _
    $region13: #{tpu_custom_call.1} parent=1 // pred_fallthru
      _
    // Predicated region
    $region14: #{tpu_custom_call.1} parent=1 // pred_check
      _
    $region15: #{tpu_custom_call.1} parent=1 // pred_check_branch
      %33 = sbr.rel (0) target = $region17
    $region16: #{tpu_custom_call.1} parent=1 // pred_region
      _
    $region17: #{tpu_custom_call.1} parent=1 // pred_fallthru
      _
    // Predicated region
    $region18: #{tpu_custom_call.1} parent=1 // pred_check
      _
    $region19: #{tpu_custom_call.1} parent=1 // pred_check_branch
      %35 = sbr.rel (0) target = $region21
    $region20: #{tpu_custom_call.1} parent=1 // pred_region
      %37 = vsyncadd [#allocation5], 0
      %s38 = sshll.u32 %s4, 4
      %s39 = int_to_ptr.hbm [resolvable:$true] %s38
      %s40 = sshll.u32 [#allocation7], 4
      %s41 = int_to_ptr.vmem [resolvable:$true] %s40
      %46 = dma.hbm_to_vmem [thread:$0]  %s39, 2048, %s41, [#allocation5], 128, 128, 8
    $region21: #{tpu_custom_call.1} parent=1 // pred_fallthru
      _
    // Predicated region
    $region22: #{tpu_custom_call.1} parent=1 // pred_check
      _
    $region23: #{tpu_custom_call.1} parent=1 // pred_check_branch
      %48 = sbr.rel (0) target = $region25
    $region24: #{tpu_custom_call.1} parent=1 // pred_region
      %50 = vsyncadd [#allocation9], 0
      %s51 = sshll.u32 %s5, 4
      %s52 = int_to_ptr.hbm [resolvable:$true] %s51
      %s53 = sshll.u32 [#allocation8], 4
      %s54 = int_to_ptr.vmem [resolvable:$true] %s53
      %59 = dma.hbm_to_vmem [thread:$0]  %s52, 2048, %s54, [#allocation9], 128, 128, 8
    $region25: #{tpu_custom_call.1} parent=1 // pred_fallthru
      _
    // Predicated region
    $region26: #{tpu_custom_call.1} parent=1 // pred_check
      _
    $region27: #{tpu_custom_call.1} parent=1 // pred_check_branch
      %61 = sbr.rel (0) target = $region29
    $region28: #{tpu_custom_call.1} parent=1 // pred_region
      %63 = vsyncadd [#allocation9], 0
      %s64 = sshll.u32 %s6, 4
      %s65 = int_to_ptr.hbm [resolvable:$true] %s64
      %s66 = sshll.u32 [#allocation10], 4
      %s67 = int_to_ptr.vmem [resolvable:$true] %s66
      %72 = dma.hbm_to_vmem [thread:$0]  %s65, 2048, %s67, [#allocation9], 128, 128, 8
    $region29: #{tpu_custom_call.1} parent=1 // pred_fallthru
      _
    // Predicated region
    $region30: #{tpu_custom_call.1} parent=1 // pred_check
      _
    $region31: #{tpu_custom_call.1} parent=1 // pred_check_branch
      %74 = sbr.rel (0) target = $region33
    $region32: #{tpu_custom_call.1} parent=1 // pred_region
      %76 = vsyncadd [#allocation12], 0
      %s77 = sshll.u32 %s7, 4
      %s78 = int_to_ptr.hbm [resolvable:$true] %s77
      %s79 = sshll.u32 [#allocation11], 4
      %s80 = int_to_ptr.vmem [resolvable:$true] %s79
      %85 = dma.hbm_to_vmem [thread:$0]  %s78, 2048, %s80, [#allocation12], 128, 128, 8
    $region33: #{tpu_custom_call.1} parent=1 // pred_fallthru
      _
    // Predicated region
    $region34: #{tpu_custom_call.1} parent=1 // pred_check
      _
    $region35: #{tpu_custom_call.1} parent=1 // pred_check_branch
      %87 = sbr.rel (0) target = $region37
    $region36: #{tpu_custom_call.1} parent=1 // pred_region
      %89 = vsyncadd [#allocation12], 0
      %s90 = sshll.u32 %s8, 4
      %s91 = int_to_ptr.hbm [resolvable:$true] %s90
      %s92 = sshll.u32 [#allocation13], 4
      %s93 = int_to_ptr.vmem [resolvable:$true] %s92
      %98 = dma.hbm_to_vmem [thread:$0]  %s91, 2048, %s93, [#allocation12], 128, 128, 8
    $region37: #{tpu_custom_call.1} parent=1 // pred_fallthru
      _
    // Predicated region
    $region38: #{tpu_custom_call.1} parent=1 // pred_check
      _
    $region39: #{tpu_custom_call.1} parent=1 // pred_check_branch
      %100 = sbr.rel (0) target = $region41
    $region40: #{tpu_custom_call.1} parent=1 // pred_region
      %102 = dma.done [#allocation6], 16
    $region41: #{tpu_custom_call.1} parent=1 // pred_fallthru
      _
    // Predicated region
    $region42: #{tpu_custom_call.1} parent=1 // pred_check
      _
    $region43: #{tpu_custom_call.1} parent=1 // pred_check_branch
      %104 = sbr.rel (0) target = $region45
    $region44: #{tpu_custom_call.1} parent=1 // pred_region
      %106 = dma.done [#allocation5], 2048
    $region45: #{tpu_custom_call.1} parent=1 // pred_fallthru
      _
    // Predicated region
    $region46: #{tpu_custom_call.1} parent=1 // pred_check
      _
    $region47: #{tpu_custom_call.1} parent=1 // pred_check_branch
      %108 = sbr.rel (0) target = $region49
    $region48: #{tpu_custom_call.1} parent=1 // pred_region
      %110 = dma.done [#allocation9], 2048
    $region49: #{tpu_custom_call.1} parent=1 // pred_fallthru
      _
    // Predicated region
    $region50: #{tpu_custom_call.1} parent=1 // pred_check
      _
    $region51: #{tpu_custom_call.1} parent=1 // pred_check_branch
      %112 = sbr.rel (0) target = $region53
    $region52: #{tpu_custom_call.1} parent=1 // pred_region
      %114 = dma.done [#allocation9], 2048
    $region53: #{tpu_custom_call.1} parent=1 // pred_fallthru
      _
    // Predicated region
    $region54: #{tpu_custom_call.1} parent=1 // pred_check
      _
    $region55: #{tpu_custom_call.1} parent=1 // pred_check_branch
      %116 = sbr.rel (0) target = $region57
    $region56: #{tpu_custom_call.1} parent=1 // pred_region
      %118 = dma.done [#allocation12], 2048
    $region57: #{tpu_custom_call.1} parent=1 // pred_fallthru
      _
    // Predicated region
    $region58: #{tpu_custom_call.1} parent=1 // pred_check
      _
    $region59: #{tpu_custom_call.1} parent=1 // pred_check_branch
      %120 = sbr.rel (0) target = $region61
    $region60: #{tpu_custom_call.1} parent=1 // pred_region
      %122 = dma.done [#allocation12], 2048
    $region61: #{tpu_custom_call.1} parent=1 // pred_fallthru
      _
    %123 = sfence
    %v124 = vld [vmem:[%s1] sm:$0xff]
    %v125 = vld [vmem:[%s2] sm:$0xff]
    %v126 = vld [vmem:[%s3] sm:$0xff]
    %v127 = vld [vmem:[%s3 + $0x8] sm:$0xf]
    %128 = vadd.xlane.f32.xlu0 %v124
    %v129 = vpop.xlane.xlu0 %128
    %v130 = vrcp.pop 128.0
    %v131 = vmul.f32 128.0, %v130
    %v132 = vsub.f32 1.0, %v131
    %v133 = vmul.f32 %v130, %v132
    %v134 = vadd.f32 %v130, %v133
    %vm135 = vweird.f32 %v130
    %v136 = vsel %vm135, %v130, %v134
    %v137 = vmul.f32 %v129, %v136
    %138 = vadd.xlane.f32.xlu0 %v125
    %v139 = vpop.xlane.xlu0 %138
    %v140 = vmul.f32 %v139, %v136
    %v141 = vadd.f32 %v137, %v140
    %v142 = vmul.f32 %v141, 0.5
    %v143 = vsub.f32 %v124, %v142
    %v144 = vmul.f32 %v143, %v143
    %145 = vadd.xlane.f32.xlu0 %v144
    %v146 = vpop.xlane.xlu0 %145
    %v147 = vmul.f32 %v146, %v136
    %v148 = vsub.f32 %v125, %v142
    %v149 = vmul.f32 %v148, %v148
    %150 = vadd.xlane.f32.xlu0 %v149
    %v151 = vpop.xlane.xlu0 %150
    %v152 = vmul.f32 %v151, %v136
    %v153 = vadd.f32 %v147, %v152
    %v154 = vmul.f32 %v153, 0.5
    %v155 = vadd.f32 %v154, 1e-05
    %v156 = vrsqrt.pop %v155
    %v157 = vmul.f32 %v156, %v155
    %v158 = vmul.f32 %v157, %v156
    %v159 = vmul.f32 0.5, %v158
    %v160 = vsub.f32 1.5, %v159
    %v161 = vmul.f32 %v156, %v160
    %vm162 = vweird.f32 %v155
    %vm163 = vweird.f32 %v156
    %vm164 = vmor %vm162, %vm163
    %v165 = vsel %vm164, %v156, %v161
    %v166 = vmul.f32 %v143, %v165
    %v167 = vperm.slane %v126, 0
    %v168 = vmul.f32 %v166, %v167
    %v169 = vperm.slane %v126, 2
    %v170 = vadd.f32 %v168, %v169
    %v171 = vmul.f32 %v148, %v165
    %v172 = vperm.slane %v126, 1
    %v173 = vmul.f32 %v171, %v172
    %v174 = vperm.slane %v126, 3
    %v175 = vadd.f32 %v173, %v174
    %v176 = vld [vmem:[#allocation7] sm:$0xff]
    %v177 = vld [vmem:[#allocation7 + $0x8] sm:$0xff]
    %v178 = vld [vmem:[#allocation7 + $0x10] sm:$0xff]
    %v179 = vld [vmem:[#allocation7 + $0x18] sm:$0xff]
    %v180 = vld [vmem:[#allocation7 + $0x20] sm:$0xff]
    %v181 = vld [vmem:[#allocation7 + $0x28] sm:$0xff]
    %v182 = vld [vmem:[#allocation7 + $0x30] sm:$0xff]
    %v183 = vld [vmem:[#allocation7 + $0x38] sm:$0xff]
    %v184 = vld [vmem:[#allocation7 + $0x40] sm:$0xff]
    %v185 = vld [vmem:[#allocation7 + $0x48] sm:$0xff]
    %v186 = vld [vmem:[#allocation7 + $0x50] sm:$0xff]
    %v187 = vld [vmem:[#allocation7 + $0x58] sm:$0xff]
    %v188 = vld [vmem:[#allocation7 + $0x60] sm:$0xff]
    %v189 = vld [vmem:[#allocation7 + $0x68] sm:$0xff]
    %v190 = vld [vmem:[#allocation7 + $0x70] sm:$0xff]
    %v191 = vld [vmem:[#allocation7 + $0x78] sm:$0xff]
    %v192 = vld [vmem:[#allocation8] sm:$0xff]
    %v193 = vld [vmem:[#allocation8 + $0x8] sm:$0xff]
    %v194 = vld [vmem:[#allocation8 + $0x10] sm:$0xff]
    %v195 = vld [vmem:[#allocation8 + $0x18] sm:$0xff]
    %v196 = vld [vmem:[#allocation8 + $0x20] sm:$0xff]
    %v197 = vld [vmem:[#allocation8 + $0x28] sm:$0xff]
    %v198 = vld [vmem:[#allocation8 + $0x30] sm:$0xff]
    %v199 = vld [vmem:[#allocation8 + $0x38] sm:$0xff]
    %v200 = vld [vmem:[#allocation8 + $0x40] sm:$0xff]
    %v201 = vld [vmem:[#allocation8 + $0x48] sm:$0xff]
    %v202 = vld [vmem:[#allocation8 + $0x50] sm:$0xff]
    %v203 = vld [vmem:[#allocation8 + $0x58] sm:$0xff]
    %v204 = vld [vmem:[#allocation8 + $0x60] sm:$0xff]
    %v205 = vld [vmem:[#allocation8 + $0x68] sm:$0xff]
    %v206 = vld [vmem:[#allocation8 + $0x70] sm:$0xff]
    %v207 = vld [vmem:[#allocation8 + $0x78] sm:$0xff]
    %208 = vmatpush.msra.mxu0 %v207
    %209 = vmatpush.msra.mxu0 %v206
    %210 = vmatpush.msra.mxu0 %v205
    %211 = vmatpush.msra.mxu0 %v204
    %212 = vmatpush.msra.mxu0 %v203
    %213 = vmatpush.msra.mxu0 %v202
    %214 = vmatpush.msra.mxu0 %v201
    %215 = vmatpush.msra.mxu0 %v200
    %216 = vmatpush.msra.mxu0 %v199
    %217 = vmatpush.msra.mxu0 %v198
    %218 = vmatpush.msra.mxu0 %v197
    %219 = vmatpush.msra.mxu0 %v196
    %220 = vmatpush.msra.mxu0 %v195
    %221 = vmatpush.msra.mxu0 %v194
    %222 = vmatpush.msra.mxu0 %v193
    %223 = vmatpush.msra.mxu0 %v192
    %224 = vmatmul.f32.gmra.mxu0 %v175
    %v225 = vpop.f32.mrf.mxu0
    %v226 = vadd.f32 0.0, %v225
    %227 = vdwg.mxu0
    %228 = vmatpush.msra.mxu0 %v191
    %229 = vmatpush.msra.mxu0 %v190
    %230 = vmatpush.msra.mxu0 %v189
    %231 = vmatpush.msra.mxu0 %v188
    %232 = vmatpush.msra.mxu0 %v187
    %233 = vmatpush.msra.mxu0 %v186
    %234 = vmatpush.msra.mxu0 %v185
    %235 = vmatpush.msra.mxu0 %v184
    %236 = vmatpush.msra.mxu0 %v183
    %237 = vmatpush.msra.mxu0 %v182
    %238 = vmatpush.msra.mxu0 %v181
    %239 = vmatpush.msra.mxu0 %v180
    %240 = vmatpush.msra.mxu0 %v179
    %241 = vmatpush.msra.mxu0 %v178
    %242 = vmatpush.msra.mxu0 %v177
    %243 = vmatpush.msra.mxu0 %v176
    %244 = vmatmul.f32.gmra.mxu0 %v170
    %v245 = vpop.f32.mrf.mxu0
    %v246 = vadd.f32 %v226, %v245
    %247 = vdwg.mxu0
    %v248 = vperm.slane %v126, 4
    %v249 = vadd.f32 %v246, %v248
    %v250 = vmul.f32 %v249, 0.5
    %v251 = vmul.f32 %v249, 0.70710677
    %vm252 = vcmp.ge.f32.partialorder %v251, 0.0
    %v253 = vsub.f32 0.0, %v251
    %v254 = vsel %vm252, %v251, %v253
    %v255 = vmul.f32 %v254, 0.3275911
    %v256 = vadd.f32 %v255, 1.0
    %v257 = vrcp.pop %v256
    %v258 = vmul.f32 %v256, %v257
    %v259 = vsub.f32 1.0, %v258
    %v260 = vmul.f32 %v257, %v259
    %v261 = vadd.f32 %v257, %v260
    %vm262 = vweird.f32 %v256
    %vm263 = vweird.f32 %v257
    %vm264 = vmor %vm262, %vm263
    %v265 = vsel %vm264, %v257, %v261
    %v266 = vand.u32 2147483647, %v256
    %vm267 = vcmp.eq.f32.partialorder %v266, 8.507059e+37
    %v268 = vand.u32 %v256, 2147483648
    %v269 = vor.u32 1.1754944e-38, %v268
    %v270 = vsel %vm267, %v269, %v265
    %v271 = vmul.f32 1.0, %v270
    %v272 = vmul.f32 %v271, 1.0614054
    %v273 = vadd.f32 %v272, -1.4531521
    %v274 = vmul.f32 %v273, %v271
    %v275 = vadd.f32 %v274, 1.4214138
    %v276 = vmul.f32 %v275, %v271
    %v277 = vadd.f32 %v276, -0.28449672
    %v278 = vmul.f32 %v277, %v271
    %v279 = vadd.f32 %v278, 0.2548296
    %v280 = vmul.f32 %v279, %v271
    %v281 = vsub.f32 0.0, %v254
    %v282 = vmul.f32 %v281, %v254
    %v283 = vmul.f32 %v282, 1.442695
    %v284 = vpow.pop %v283
    %v285 = vmul.f32 %v280, %v284
    %v286 = vsub.f32 1.0, %v285
    %v287 = vsub.f32 0.0, %v286
    %v288 = vsel %vm252, %v286, %v287
    %v289 = vadd.f32 %v288, 1.0
    %v290 = vmul.f32 %v250, %v289
    %v291 = vld [vmem:[#allocation10] sm:$0xff]
    %v292 = vld [vmem:[#allocation10 + $0x8] sm:$0xff]
    %v293 = vld [vmem:[#allocation10 + $0x10] sm:$0xff]
    %v294 = vld [vmem:[#allocation10 + $0x18] sm:$0xff]
    %v295 = vld [vmem:[#allocation10 + $0x20] sm:$0xff]
    %v296 = vld [vmem:[#allocation10 + $0x28] sm:$0xff]
    %v297 = vld [vmem:[#allocation10 + $0x30] sm:$0xff]
    %v298 = vld [vmem:[#allocation10 + $0x38] sm:$0xff]
    %v299 = vld [vmem:[#allocation10 + $0x40] sm:$0xff]
    %v300 = vld [vmem:[#allocation10 + $0x48] sm:$0xff]
    %v301 = vld [vmem:[#allocation10 + $0x50] sm:$0xff]
    %v302 = vld [vmem:[#allocation10 + $0x58] sm:$0xff]
    %v303 = vld [vmem:[#allocation10 + $0x60] sm:$0xff]
    %v304 = vld [vmem:[#allocation10 + $0x68] sm:$0xff]
    %v305 = vld [vmem:[#allocation10 + $0x70] sm:$0xff]
    %v306 = vld [vmem:[#allocation10 + $0x78] sm:$0xff]
    %v307 = vperm.slane %v126, 5
    %308 = vmatpush.msra.mxu0 %v306
    %309 = vmatpush.msra.mxu0 %v305
    %310 = vmatpush.msra.mxu0 %v304
    %311 = vmatpush.msra.mxu0 %v303
    %312 = vmatpush.msra.mxu0 %v302
    %313 = vmatpush.msra.mxu0 %v301
    %314 = vmatpush.msra.mxu0 %v300
    %315 = vmatpush.msra.mxu0 %v299
    %316 = vmatpush.msra.mxu0 %v298
    %317 = vmatpush.msra.mxu0 %v297
    %318 = vmatpush.msra.mxu0 %v296
    %319 = vmatpush.msra.mxu0 %v295
    %320 = vmatpush.msra.mxu0 %v294
    %321 = vmatpush.msra.mxu0 %v293
    %322 = vmatpush.msra.mxu0 %v292
    %323 = vmatpush.msra.mxu0 %v291
    %324 = vmatmul.f32.gmra.mxu0 %v290
    %v325 = vpop.f32.mrf.mxu0
    %v326 = vadd.f32 %v307, %v325
    %327 = vdwg.mxu0
    %v328 = vadd.f32 %v326, %v124
    %329 = vadd.xlane.f32.xlu0 %v328
    %v330 = vpop.xlane.xlu0 %329
    %v331 = vmul.f32 %v330, %v136
    %v332 = vsub.f32 %v328, %v331
    %v333 = vmul.f32 %v332, %v332
    %334 = vadd.xlane.f32.xlu0 %v333
    %v335 = vpop.xlane.xlu0 %334
    %v336 = vmul.f32 %v335, %v136
    %v337 = vadd.f32 %v336, 1e-05
    %v338 = vrsqrt.pop %v337
    %v339 = vmul.f32 %v338, %v337
    %v340 = vmul.f32 %v339, %v338
    %v341 = vmul.f32 0.5, %v340
    %v342 = vsub.f32 1.5, %v341
    %v343 = vmul.f32 %v338, %v342
    %vm344 = vweird.f32 %v337
    %vm345 = vweird.f32 %v338
    %vm346 = vmor %vm344, %vm345
    %v347 = vsel %vm346, %v338, %v343
    %v348 = vmul.f32 %v332, %v347
    %v349 = vperm.slane %v126, 6
    %v350 = vmul.f32 %v348, %v349
    %v351 = vperm.slane %v126, 7
    %v352 = vadd.f32 %v350, %v351
    %v353 = vld [vmem:[#allocation11] sm:$0xff]
    %v354 = vld [vmem:[#allocation11 + $0x8] sm:$0xff]
    %v355 = vld [vmem:[#allocation11 + $0x10] sm:$0xff]
    %v356 = vld [vmem:[#allocation11 + $0x18] sm:$0xff]
    %v357 = vld [vmem:[#allocation11 + $0x20] sm:$0xff]
    %v358 = vld [vmem:[#allocation11 + $0x28] sm:$0xff]
    %v359 = vld [vmem:[#allocation11 + $0x30] sm:$0xff]
    %v360 = vld [vmem:[#allocation11 + $0x38] sm:$0xff]
    %v361 = vld [vmem:[#allocation11 + $0x40] sm:$0xff]
    %v362 = vld [vmem:[#allocation11 + $0x48] sm:$0xff]
    %v363 = vld [vmem:[#allocation11 + $0x50] sm:$0xff]
    %v364 = vld [vmem:[#allocation11 + $0x58] sm:$0xff]
    %v365 = vld [vmem:[#allocation11 + $0x60] sm:$0xff]
    %v366 = vld [vmem:[#allocation11 + $0x68] sm:$0xff]
    %v367 = vld [vmem:[#allocation11 + $0x70] sm:$0xff]
    %v368 = vld [vmem:[#allocation11 + $0x78] sm:$0xff]
    %v369 = vperm.slane %v127, 0
    %370 = vmatpush.msra.mxu0 %v368
    %371 = vmatpush.msra.mxu0 %v367
    %372 = vmatpush.msra.mxu0 %v366
    %373 = vmatpush.msra.mxu0 %v365
    %374 = vmatpush.msra.mxu0 %v364
    %375 = vmatpush.msra.mxu0 %v363
    %376 = vmatpush.msra.mxu0 %v362
    %377 = vmatpush.msra.mxu0 %v361
    %378 = vmatpush.msra.mxu0 %v360
    %379 = vmatpush.msra.mxu0 %v359
    %380 = vmatpush.msra.mxu0 %v358
    %381 = vmatpush.msra.mxu0 %v357
    %382 = vmatpush.msra.mxu0 %v356
    %383 = vmatpush.msra.mxu0 %v355
    %384 = vmatpush.msra.mxu0 %v354
    %385 = vmatpush.msra.mxu0 %v353
    %386 = vmatmul.f32.gmra.mxu0 %v352
    %v387 = vpop.f32.mrf.mxu0
    %v388 = vadd.f32 %v369, %v387
    %389 = vdwg.mxu0
    %v390 = vmul.f32 %v388, 0.5
    %v391 = vmul.f32 %v388, 0.70710677
    %vm392 = vcmp.ge.f32.partialorder %v391, 0.0
    %v393 = vsub.f32 0.0, %v391
    %v394 = vsel %vm392, %v391, %v393
    %v395 = vmul.f32 %v394, 0.3275911
    %v396 = vadd.f32 %v395, 1.0
    %v397 = vrcp.pop %v396
    %v398 = vmul.f32 %v396, %v397
    %v399 = vsub.f32 1.0, %v398
    %v400 = vmul.f32 %v397, %v399
    %v401 = vadd.f32 %v397, %v400
    %vm402 = vweird.f32 %v396
    %vm403 = vweird.f32 %v397
    %vm404 = vmor %vm402, %vm403
    %v405 = vsel %vm404, %v397, %v401
    %v406 = vand.u32 2147483647, %v396
    %vm407 = vcmp.eq.f32.partialorder %v406, 8.507059e+37
    %v408 = vand.u32 %v396, 2147483648
    %v409 = vor.u32 1.1754944e-38, %v408
    %v410 = vsel %vm407, %v409, %v405
    %v411 = vmul.f32 1.0, %v410
    %v412 = vmul.f32 %v411, 1.0614054
    %v413 = vadd.f32 %v412, -1.4531521
    %v414 = vmul.f32 %v413, %v411
    %v415 = vadd.f32 %v414, 1.4214138
    %v416 = vmul.f32 %v415, %v411
    %v417 = vadd.f32 %v416, -0.28449672
    %v418 = vmul.f32 %v417, %v411
    %v419 = vadd.f32 %v418, 0.2548296
    %v420 = vmul.f32 %v419, %v411
    %v421 = vsub.f32 0.0, %v394
    %v422 = vmul.f32 %v421, %v394
    %v423 = vmul.f32 %v422, 1.442695
    %v424 = vpow.pop %v423
    %v425 = vmul.f32 %v420, %v424
    %v426 = vsub.f32 1.0, %v425
    %v427 = vsub.f32 0.0, %v426
    %v428 = vsel %vm392, %v426, %v427
    %v429 = vadd.f32 %v428, 1.0
    %v430 = vmul.f32 %v390, %v429
    %v431 = vld [vmem:[#allocation13] sm:$0xff]
    %v432 = vld [vmem:[#allocation13 + $0x8] sm:$0xff]
    %v433 = vld [vmem:[#allocation13 + $0x10] sm:$0xff]
    %v434 = vld [vmem:[#allocation13 + $0x18] sm:$0xff]
    %v435 = vld [vmem:[#allocation13 + $0x20] sm:$0xff]
    %v436 = vld [vmem:[#allocation13 + $0x28] sm:$0xff]
    %v437 = vld [vmem:[#allocation13 + $0x30] sm:$0xff]
    %v438 = vld [vmem:[#allocation13 + $0x38] sm:$0xff]
    %v439 = vld [vmem:[#allocation13 + $0x40] sm:$0xff]
    %v440 = vld [vmem:[#allocation13 + $0x48] sm:$0xff]
    %v441 = vld [vmem:[#allocation13 + $0x50] sm:$0xff]
    %v442 = vld [vmem:[#allocation13 + $0x58] sm:$0xff]
    %v443 = vld [vmem:[#allocation13 + $0x60] sm:$0xff]
    %v444 = vld [vmem:[#allocation13 + $0x68] sm:$0xff]
    %v445 = vld [vmem:[#allocation13 + $0x70] sm:$0xff]
    %v446 = vld [vmem:[#allocation13 + $0x78] sm:$0xff]
    %v447 = vperm.slane %v127, 1
    %448 = vmatpush.msra.mxu0 %v446
    %449 = vmatpush.msra.mxu0 %v445
    %450 = vmatpush.msra.mxu0 %v444
    %451 = vmatpush.msra.mxu0 %v443
    %452 = vmatpush.msra.mxu0 %v442
    %453 = vmatpush.msra.mxu0 %v441
    %454 = vmatpush.msra.mxu0 %v440
    %455 = vmatpush.msra.mxu0 %v439
    %456 = vmatpush.msra.mxu0 %v438
    %457 = vmatpush.msra.mxu0 %v437
    %458 = vmatpush.msra.mxu0 %v436
    %459 = vmatpush.msra.mxu0 %v435
    %460 = vmatpush.msra.mxu0 %v434
    %461 = vmatpush.msra.mxu0 %v433
    %462 = vmatpush.msra.mxu0 %v432
    %463 = vmatpush.msra.mxu0 %v431
    %464 = vmatmul.f32.gmra.mxu0 %v430
    %v465 = vpop.f32.mrf.mxu0
    %v466 = vadd.f32 %v447, %v465
    %467 = vdwg.mxu0
    %v468 = vadd.f32 %v328, %v466
    %469 = vadd.xlane.f32.xlu0 %v468
    %v470 = vpop.xlane.xlu0 %469
    %v471 = vmul.f32 %v470, %v136
    %v472 = vsub.f32 %v468, %v471
    %v473 = vmul.f32 %v472, %v472
    %474 = vadd.xlane.f32.xlu0 %v473
    %v475 = vpop.xlane.xlu0 %474
    %v476 = vmul.f32 %v475, %v136
    %v477 = vadd.f32 %v476, 1e-05
    %v478 = vrsqrt.pop %v477
    %v479 = vmul.f32 %v478, %v477
    %v480 = vmul.f32 %v479, %v478
    %v481 = vmul.f32 0.5, %v480
    %v482 = vsub.f32 1.5, %v481
    %v483 = vmul.f32 %v478, %v482
    %vm484 = vweird.f32 %v477
    %vm485 = vweird.f32 %v478
    %vm486 = vmor %vm484, %vm485
    %v487 = vsel %vm486, %v478, %v483
    %v488 = vmul.f32 %v472, %v487
    %v489 = vperm.slane %v127, 2
    %v490 = vmul.f32 %v488, %v489
    %v491 = vperm.slane %v127, 3
    %v492 = vadd.f32 %v490, %v491
    %493 = vst [vmem:[#allocation2] sm:$0xff] %v492
    %s494 = smul.u32 0, 8
    loop: start=0, step=1, limit=8
    $region62: #{tpu_custom_call.1} parent=1 // loop_pre_header
      _
    $region63: #{tpu_custom_call.1} parent=1 // loop_header
      %s496 = sphi 0, %s500
      %p497 = scmp.ge.s32.totalorder %s496, 8
    $region64: #{tpu_custom_call.1} parent=1 // loop_header_branch
      %499 = sbr.rel (%p497) target = $region68
    $region65: #{tpu_custom_call.1} parent=1 // loop_body
      %s501 = sadd.s32 %s494, %s496
      %s502 = sld [smem:[#allocation4 + %s501]]
      %p503 = scmp.ge.s32.totalorder %s502, 0
      // Predicated region
      $region69: #{tpu_custom_call.1} parent=65 // pred_check
        %p504 = pneg %p503
      $region70: #{tpu_custom_call.1} parent=65 // pred_check_branch
        %506 = sbr.rel (%p504) target = $region72
      $region71: #{tpu_custom_call.1} parent=65 // pred_region
        %s507 = scalar_lea.vmem [#allocation2], %s496
        %s508 = scalar_lea.hbm %s10, %s502
        // Predicated region
        $region73: #{tpu_custom_call.1} parent=71 // pred_check
          _
        $region74: #{tpu_custom_call.1} parent=71 // pred_check_branch
          %510 = sbr.rel target = $region76
        $region75: #{tpu_custom_call.1} parent=71 // pred_region
          %511 = sst [smem:[#allocation16]] [#allocation15]
          %512 = sst [smem:[#allocation17]] [#allocation14]
        $region76: #{tpu_custom_call.1} parent=71 // pred_fallthru
          _
        %514 = shalt.err (0)
        %s516 = sshll.u32 %s507, 4
        %s517 = int_to_ptr.vmem [resolvable:$true] %s516
        %s518 = sshll.u32 %s508, 4
        %s519 = int_to_ptr.hbm [resolvable:$true] %s518
        %521 = dma.vmem_to_hbm [thread:$0]  %s517, 16, %s519, [#allocation3]
      $region72: #{tpu_custom_call.1} parent=65 // pred_fallthru
        _
    $region66: #{tpu_custom_call.1} parent=1 // loop_footer
      %s500 = sadd.s32 1, %s496
    $region67: #{tpu_custom_call.1} parent=1 // loop_footer_branch
      %495 = sbr.rel target = $region63
    $region68: #{tpu_custom_call.1} parent=1 // loop_exit
      _
    loop: start=0, step=1, limit=8
    $region77: #{tpu_custom_call.1} parent=1 // loop_pre_header
      _
    $region78: #{tpu_custom_call.1} parent=1 // loop_header
      %s523 = sphi 0, %s527
      %p524 = scmp.ge.s32.totalorder %s523, 8
    $region79: #{tpu_custom_call.1} parent=1 // loop_header_branch
      %526 = sbr.rel (%p524) target = $region83
    $region80: #{tpu_custom_call.1} parent=1 // loop_body
      %s528 = sadd.s32 %s494, %s523
      %s529 = sld [smem:[#allocation4 + %s528]]
      %p530 = scmp.ge.s32.totalorder %s529, 0
      // Predicated region
      $region84: #{tpu_custom_call.1} parent=80 // pred_check
        %p531 = pneg %p530
      $region85: #{tpu_custom_call.1} parent=80 // pred_check_branch
        %533 = sbr.rel (%p531) target = $region87
      $region86: #{tpu_custom_call.1} parent=80 // pred_region
        %s534 = smul.u32 1, 1
        %s535 = sshll.u32 %s534, 4
        %536 = dma.done [#allocation3], %s535
      $region87: #{tpu_custom_call.1} parent=80 // pred_fallthru
        _
    $region81: #{tpu_custom_call.1} parent=1 // loop_footer
      %s527 = sadd.s32 1, %s523
    $region82: #{tpu_custom_call.1} parent=1 // loop_footer_branch
      %522 = sbr.rel target = $region78
    $region83: #{tpu_custom_call.1} parent=1 // loop_exit
      _
    %537 = vsyncpa [#allocation5], 1
    %538 = vsyncpa [#allocation9], 1
    %539 = vsyncpa [#allocation12], 1
    %540 = vsyncpa [#allocation6], 1
  %541 = vsyncmov [#allocation3]
  %s542 = vpop.sfrf %541
  %p543 = scmp.eq.s32.totalorder %s542, 0
  %p544 = pneg %p543
  %546 = shalt.err (%p544)

</llo_original>
